<compile_context>
chip_gen: v6e
topology: v6e:2x2x1
jax: 0.10.0
libtpu: 0.0.40
codegen_flags: <defaults>
</compile_context>

<pallas_src>
import math
from functools import partial

import jax
import jax.numpy as jnp
from jax.experimental import pallas as pl
from jax.experimental.pallas import tpu as pltpu


def _gelu_exact(x):
    # nn.GELU() default = exact erf-based GELU.
    return 0.5 * x * (1.0 + jax.lax.erf(x * (1.0 / math.sqrt(2.0))))


def _round_up(n, m):
    return ((n + m - 1) // m) * m


def ffn_kernel(x_ref, w1_ref, b1_ref, w2_ref, b2_ref, o_ref, acc_ref, *,
               approximate_gelu=True):
    # x_ref: (tm, Fp), w1_ref: (Fp, th), b1_ref: (1, th), w2_ref: (th, Fp),
    # b2_ref: (1, Fp), acc_ref: (tm, Fp) f32, resident across the H-chunk axis.
    k = pl.program_id(1)

    # First linear on the current H-chunk (MXU, f32 accumulation) + per-chunk bias.
    h = jnp.dot(x_ref[...], w1_ref[...], preferred_element_type=jnp.float32)
    h = h + b1_ref[...].astype(jnp.float32)
    if approximate_gelu:
        h = jax.nn.gelu(h, approximate=True)     # tanh -> EUP slot
    else:
        h = _gelu_exact(h)                        # erf -> VALU polynomial
    # TODO(synk): nn.Dropout is identity in eval mode; training-mode stochastic dropout
    # would need pltpu.prng_seed + pltpu.prng_random_bits masking here.

    # Second linear: this H-chunk's partial contribution to the (tm, Fp) output.
    part = jnp.dot(h.astype(w2_ref.dtype), w2_ref[...],
                   preferred_element_type=jnp.float32)

    @pl.when(k == 0)
    def _():
        acc_ref[...] = part          # direct write: no zero-init + add pass

    @pl.when(k > 0)
    def _():
        acc_ref[...] += part

    @pl.when(k == pl.num_programs(1) - 1)
    def _():
        o_ref[...] = (acc_ref[...] + b2_ref[...].astype(jnp.float32)).astype(o_ref.dtype)


def _pick_tm(M, tm_req):
    # Roofline: FLOPs per weight byte ~= tm (bf16). v6e needs ~560, v7x ~620/TC,
    # v5e ~240 -> tm=512 default clears v6e/v7x; 256 is enough on v5e.
    tm_req = max(8, _round_up(tm_req, 8))
    cap = _round_up(M, 8)
    if cap <= tm_req:
        # Whole M fits one tile. On v7x (2 TCs) keep >= 2 'parallel' row tiles when
        # there is enough work to shard across cores.
        if M >= 1024:
            return _round_up((M + 1) // 2, 8)
        return cap
    # Largest candidate tile with bounded row-padding waste.
    for cand in (tm_req, 512, 256, 128):
        if cand <= tm_req and _round_up(M, cand) - M <= max(M // 8, cand // 4):
            return cand
    return 128


def _pick_th(Fp, H, th_req, tm, cd_bytes, out_bytes, budget=44 * 1024 * 1024):
    # th only sizes the streamed weight slabs (not the MXU M/N dims), so it is the
    # cheapest knob to keep total VMEM under the v7x 64 MiB physical limit.
    h_cap = _round_up(H, 128)
    th = min(max(128, _round_up(th_req, 128)), h_cap)
    fixed = (2 * tm * Fp * cd_bytes      # x tiles, double-buffered
             + 2 * tm * Fp * out_bytes   # out tiles, double-buffered
             + tm * Fp * 4               # f32 accumulator scratch
             + 2 * Fp * 4)               # b2

    def vmem(t):
        return (fixed
                + 2 * 2 * Fp * t * cd_bytes   # W1 + W2 slabs, double-buffered
                + 2 * t * 4                   # b1
                + 2 * tm * t * 4)             # h / GELU f32 temporaries headroom

    while th > 128 and vmem(th) > budget:
        th -= 128
    return th


def ffn_pallas(x, w1, b1, w2, b2, *, tm=512, th=512,
               compute_dtype=jnp.bfloat16, approximate_gelu=True):
    B, S, F = x.shape
    H = w1.shape[1]
    M = B * S

    cd = jnp.dtype(compute_dtype)
    cd_bytes = cd.itemsize
    out_dtype = x.dtype
    out_bytes = jnp.dtype(out_dtype).itemsize

    # Pad feature dim to a multiple of 128 for lane-dense, unmasked output stores.
    Fp = _round_up(F, 128)
    tm = _pick_tm(M, tm)
    Mp = _round_up(M, tm)
    th = _pick_th(Fp, H, th, tm, cd_bytes, out_bytes)
    Hp = _round_up(H, th)

    # Pad + cast operands. Hidden padding has zero weights and zero bias -> GELU(0)=0
    # -> zero contribution; feature/row padding is sliced off below.
    x2 = jnp.pad(x.reshape(M, F), ((0, Mp - M), (0, Fp - F))).astype(cd)
    w1p = jnp.pad(w1, ((0, Fp - F), (0, Hp - H))).astype(cd)
    w2p = jnp.pad(w2, ((0, Hp - H), (0, Fp - F))).astype(cd)
    b1p = jnp.pad(b1.astype(jnp.float32), (0, Hp - H)).reshape(1, Hp)
    b2p = jnp.pad(b2.astype(jnp.float32), (0, Fp - F)).reshape(1, Fp)

    n_row = Mp // tm
    n_h = Hp // th

    # Explicit VMEM budget (double-buffered inputs/outputs + resident accumulator).
    vmem_est = (2 * tm * Fp * cd_bytes + 2 * tm * Fp * out_bytes + tm * Fp * 4
                + 2 * 2 * Fp * th * cd_bytes + 2 * (th + Fp) * 4 + 2 * tm * th * 4)
    vmem_limit = int(min(max(vmem_est * 5 // 4, 32 * 1024 * 1024), 56 * 1024 * 1024))

    cost = pl.CostEstimate(
        flops=4 * Mp * Fp * Hp,                     # two (Mp, Fp, Hp)-class matmuls
        transcendentals=Mp * Hp,                    # one tanh/erf per hidden activation
        bytes_accessed=(Mp * Fp * cd_bytes + Mp * Fp * out_bytes
                        + n_row * 2 * Fp * Hp * cd_bytes
                        + n_row * (Hp + Fp) * 4),
    )

    out = pl.pallas_call(
        partial(ffn_kernel, approximate_gelu=approximate_gelu),
        out_shape=jax.ShapeDtypeStruct((Mp, Fp), out_dtype),
        grid_spec=pltpu.PrefetchScalarGridSpec(
            num_scalar_prefetch=0,
            grid=(n_row, n_h),
            in_specs=[
                pl.BlockSpec((tm, Fp), lambda i, k: (i, 0)),   # x row-tile
                pl.BlockSpec((Fp, th), lambda i, k: (0, k)),   # W1 H-chunk
                pl.BlockSpec((1, th), lambda i, k: (0, k)),    # b1 H-chunk
                pl.BlockSpec((th, Fp), lambda i, k: (k, 0)),   # W2 H-chunk
                pl.BlockSpec((1, Fp), lambda i, k: (0, 0)),    # b2
            ],
            out_specs=pl.BlockSpec((tm, Fp), lambda i, k: (i, 0)),  # resident across k
            scratch_shapes=[pltpu.VMEM((tm, Fp), jnp.float32)],
        ),
        compiler_params=pltpu.CompilerParams(
            dimension_semantics=("parallel", "arbitrary"),
            vmem_limit_bytes=vmem_limit),
        cost_estimate=cost,
    )(x2, w1p, b1p, w2p, b2p)

    if Mp != M or Fp != F:
        out = out[:M, :F]
    return out.reshape(B, S, F)


def init_params(key, feat_dim, hid_dim):
    """Deterministic init matching the PyTorch module's reset_parameters.

    kaiming_normal_(a=0, mode='fan_in', nonlinearity='leaky_relu') -> std = sqrt(2/fan_in)
    biases keep nn.Linear default: U(-1/sqrt(fan_in), 1/sqrt(fan_in)).
    PyTorch Linear weight is [out, in]; we store the transpose [in, out].
    """
    k1, k2, k3, k4 = jax.random.split(key, 4)
    std1 = math.sqrt(2.0 / feat_dim)   # fan_in of first linear = feat_dim
    std2 = math.sqrt(2.0 / hid_dim)    # fan_in of second linear = hid_dim
    w1 = jax.random.normal(k1, (feat_dim, hid_dim), jnp.float32) * std1
    w2 = jax.random.normal(k2, (hid_dim, feat_dim), jnp.float32) * std2
    bound1 = 1.0 / math.sqrt(feat_dim)
    bound2 = 1.0 / math.sqrt(hid_dim)
    b1 = jax.random.uniform(k3, (hid_dim,), jnp.float32, -bound1, bound1)
    b2 = jax.random.uniform(k4, (feat_dim,), jnp.float32, -bound2, bound2)
    return w1, b1, w2, b2


def ffn_reference(x, w1, b1, w2, b2, *, compute_dtype=jnp.bfloat16, approximate_gelu=True):
    # Reference mirrors the kernel's precision policy (bf16-rounded operands, f32
    # accumulation, same GELU variant) so the tolerance stays meaningful.
    cd = compute_dtype
    xc = x.astype(cd).astype(jnp.float32)
    w1c = w1.astype(cd).astype(jnp.float32)
    w2c = w2.astype(cd).astype(jnp.float32)
    h = jnp.dot(xc, w1c) + b1
    h = jax.nn.gelu(h, approximate=approximate_gelu) if approximate_gelu else _gelu_exact(h)
    h = h.astype(cd).astype(jnp.float32)
    return (jnp.dot(h, w2c) + b2).astype(x.dtype)


if __name__ == "__main__":
    # Small demo shapes; F is a multiple of 128 for lane-dense output stores and
    # th=256 -> 2 H-chunks so the accumulation path over the hidden axis is exercised.
    batch, seq, feat_dim, hid_dim = 2, 8, 128, 512
    ffn_drop_prob = 0.1  # unused in eval-mode forward (dropout = identity)

    key = jax.random.PRNGKey(0)
    kx, kp = jax.random.split(key)
    x = jax.random.normal(kx, (batch, seq, feat_dim), jnp.float32)
    w1, b1, w2, b2 = init_params(kp, feat_dim, hid_dim)

    out = ffn_pallas(x, w1, b1, w2, b2, tm=512, th=256)
    out = jax.block_until_ready(out)

    ref = ffn_reference(x, w1, b1, w2, b2)
    assert out.shape == x.shape
    assert jnp.allclose(out, ref, atol=2e-2, rtol=2e-2), "mismatch vs. reference"

    print("KERNEL_OK")
</pallas_src>

<mosaic_0001>
module attributes {stable_mosaic.version = 11 : i64} {
  func.func @ffn_kernel(%arg0: i32, %arg1: i32, %arg2: memref<16x128xbf16, #tpu.memory_space<vmem>>, %arg3: memref<128x256xbf16, #tpu.memory_space<vmem>>, %arg4: memref<1x256xf32, #tpu.memory_space<vmem>>, %arg5: memref<256x128xbf16, #tpu.memory_space<vmem>>, %arg6: memref<1x128xf32, #tpu.memory_space<vmem>>, %arg7: memref<16x128xf32, #tpu.memory_space<vmem>>, %arg8: memref<16x128xf32, #tpu.memory_space<vmem>>) attributes {dimension_semantics = [#tpu.dimension_semantics<parallel>, #tpu.dimension_semantics<arbitrary>], iteration_bounds = array<i64: 1, 2>, scalar_prefetch = 0 : i64, scratch_operands = 1 : i64, tpu.core_type = #tpu.core_type<tc>, window_params = [{transform_indices = @transform_0, window_bounds = array<i64: 16, 128>}, {transform_indices = @transform_1, window_bounds = array<i64: 128, 256>}, {transform_indices = @transform_2, window_bounds = array<i64: 1, 256>}, {transform_indices = @transform_3, window_bounds = array<i64: 256, 128>}, {pipeline_mode = #tpu.pipeline_mode<synchronous>, transform_indices = @transform_4, window_bounds = array<i64: 1, 128>}, {transform_indices = @transform_5, window_bounds = array<i64: 16, 128>}]} {
    %c0 = arith.constant 0 : index
    %c0_0 = arith.constant 0 : index
    %0 = vector.load %arg2[%c0, %c0_0] : memref<16x128xbf16, #tpu.memory_space<vmem>>, vector<16x128xbf16>
    %c0_1 = arith.constant 0 : index
    %c0_2 = arith.constant 0 : index
    %1 = vector.load %arg3[%c0_1, %c0_2] : memref<128x256xbf16, #tpu.memory_space<vmem>>, vector<128x256xbf16>
    %cst = arith.constant dense<0.000000e+00> : vector<16x256xf32>
    %2 = tpu.matmul %0, %1, %cst {dimension_numbers = #tpu.dot_dimension_numbers<[1], [0], [0], [1], [0, 0, 1, 1], [], []>} : vector<16x128xbf16>, vector<128x256xbf16>, vector<16x256xf32> -> vector<16x256xf32>
    %c0_3 = arith.constant 0 : index
    %c0_4 = arith.constant 0 : index
    %3 = vector.load %arg4[%c0_3, %c0_4] : memref<1x256xf32, #tpu.memory_space<vmem>>, vector<1x256xf32>
    %4 = vector.broadcast %3 : vector<1x256xf32> to vector<16x256xf32>
    %5 = arith.addf %2, %4 : vector<16x256xf32>
    %6 = arith.mulf %5, %5 : vector<16x256xf32>
    %7 = arith.mulf %5, %6 : vector<16x256xf32>
    %cst_5 = arith.constant 4.471500e-02 : f32
    %8 = vector.broadcast %cst_5 : f32 to vector<16x256xf32>
    %9 = arith.mulf %8, %7 : vector<16x256xf32>
    %10 = arith.addf %5, %9 : vector<16x256xf32>
    %cst_6 = arith.constant 0.797884583 : f32
    %11 = vector.broadcast %cst_6 : f32 to vector<16x256xf32>
    %12 = arith.mulf %11, %10 : vector<16x256xf32>
    %13 = math.tanh %12 : vector<16x256xf32>
    %cst_7 = arith.constant 1.000000e+00 : f32
    %14 = vector.broadcast %cst_7 : f32 to vector<16x256xf32>
    %15 = arith.addf %14, %13 : vector<16x256xf32>
    %cst_8 = arith.constant 5.000000e-01 : f32
    %16 = vector.broadcast %cst_8 : f32 to vector<16x256xf32>
    %17 = arith.mulf %16, %15 : vector<16x256xf32>
    %18 = arith.mulf %5, %17 : vector<16x256xf32>
    %19 = arith.truncf %18 : vector<16x256xf32> to vector<16x256xbf16>
    %c0_9 = arith.constant 0 : index
    %c0_10 = arith.constant 0 : index
    %20 = vector.load %arg5[%c0_9, %c0_10] : memref<256x128xbf16, #tpu.memory_space<vmem>>, vector<256x128xbf16>
    %cst_11 = arith.constant dense<0.000000e+00> : vector<16x128xf32>
    %21 = tpu.matmul %19, %20, %cst_11 {dimension_numbers = #tpu.dot_dimension_numbers<[1], [0], [0], [1], [0, 0, 1, 1], [], []>} : vector<16x256xbf16>, vector<256x128xbf16>, vector<16x128xf32> -> vector<16x128xf32>
    %c0_i32 = arith.constant 0 : i32
    %22 = arith.cmpi eq, %arg1, %c0_i32 : i32
    %23 = arith.extui %22 : i1 to i32
    %c0_i32_12 = arith.constant 0 : i32
    %24 = arith.cmpi ne, %23, %c0_i32_12 : i32
    scf.if %24 {
      %c0_16 = arith.constant 0 : index
      %c0_17 = arith.constant 0 : index
      %31 = vector.load %arg8[%c0_16, %c0_17] : memref<16x128xf32, #tpu.memory_space<vmem>>, vector<16x128xf32>
      tpu.vector_store %arg8[%c0_16, %c0_17], %21 {strides = array<i32>} : memref<16x128xf32, #tpu.memory_space<vmem>>, vector<16x128xf32>,
    } else {
    }
    %c0_i32_13 = arith.constant 0 : i32
    %25 = arith.cmpi sgt, %arg1, %c0_i32_13 : i32
    %26 = arith.extui %25 : i1 to i32
    %c0_i32_14 = arith.constant 0 : i32
    %27 = arith.cmpi ne, %26, %c0_i32_14 : i32
    scf.if %27 {
      %c0_16 = arith.constant 0 : index
      %c0_17 = arith.constant 0 : index
      %31 = vector.load %arg8[%c0_16, %c0_17] : memref<16x128xf32, #tpu.memory_space<vmem>>, vector<16x128xf32>
      %32 = arith.addf %31, %21 : vector<16x128xf32>
      %c0_18 = arith.constant 0 : index
      %c0_19 = arith.constant 0 : index
      %33 = vector.load %arg8[%c0_18, %c0_19] : memref<16x128xf32, #tpu.memory_space<vmem>>, vector<16x128xf32>
      tpu.vector_store %arg8[%c0_18, %c0_19], %32 {strides = array<i32>} : memref<16x128xf32, #tpu.memory_space<vmem>>, vector<16x128xf32>,
    } else {
    }
    %c1_i32 = arith.constant 1 : i32
    %28 = arith.cmpi eq, %arg1, %c1_i32 : i32
    %29 = arith.extui %28 : i1 to i32
    %c0_i32_15 = arith.constant 0 : i32
    %30 = arith.cmpi ne, %29, %c0_i32_15 : i32
    scf.if %30 {
      %c0_16 = arith.constant 0 : index
      %c0_17 = arith.constant 0 : index
      %31 = vector.load %arg8[%c0_16, %c0_17] : memref<16x128xf32, #tpu.memory_space<vmem>>, vector<16x128xf32>
      %c0_18 = arith.constant 0 : index
      %c0_19 = arith.constant 0 : index
      %32 = vector.load %arg6[%c0_18, %c0_19] : memref<1x128xf32, #tpu.memory_space<vmem>>, vector<1x128xf32>
      %33 = vector.broadcast %32 : vector<1x128xf32> to vector<16x128xf32>
      %34 = arith.addf %31, %33 : vector<16x128xf32>
      %c0_20 = arith.constant 0 : index
      %c0_21 = arith.constant 0 : index
      %35 = vector.load %arg7[%c0_20, %c0_21] : memref<16x128xf32, #tpu.memory_space<vmem>>, vector<16x128xf32>
      tpu.vector_store %arg7[%c0_20, %c0_21], %34 {strides = array<i32>} : memref<16x128xf32, #tpu.memory_space<vmem>>, vector<16x128xf32>,
    } else {
    }
    return
  }
  func.func @transform_0(%arg0: i32, %arg1: i32) -> (i32, i32) {
    %c0_i32 = arith.constant 0 : i32
    %c0_i32_0 = arith.constant 0 : i32
    return %arg0, %c0_i32 : i32, i32
  }
  func.func @transform_1(%arg0: i32, %arg1: i32) -> (i32, i32) {
    %c0_i32 = arith.constant 0 : i32
    %c0_i32_0 = arith.constant 0 : i32
    return %c0_i32, %arg1 : i32, i32
  }
  func.func @transform_2(%arg0: i32, %arg1: i32) -> (i32, i32) {
    %c0_i32 = arith.constant 0 : i32
    %c0_i32_0 = arith.constant 0 : i32
    return %c0_i32, %arg1 : i32, i32
  }
  func.func @transform_3(%arg0: i32, %arg1: i32) -> (i32, i32) {
    %c0_i32 = arith.constant 0 : i32
    %c0_i32_0 = arith.constant 0 : i32
    return %arg1, %c0_i32 : i32, i32
  }
  func.func @transform_4(%arg0: i32, %arg1: i32) -> (i32, i32) {
    %c0_i32 = arith.constant 0 : i32
    %c0_i32_0 = arith.constant 0 : i32
    %c0_i32_1 = arith.constant 0 : i32
    return %c0_i32, %c0_i32_0 : i32, i32
  }
  func.func @transform_5(%arg0: i32, %arg1: i32) -> (i32, i32) {
    %c0_i32 = arith.constant 0 : i32
    %c0_i32_0 = arith.constant 0 : i32
    return %arg0, %c0_i32 : i32, i32
  }
}

</mosaic_0001>

<llo_original>
// kernel: tpu_custom_call.1
$region0: #{tpu_custom_call.1}
  #allocation0 [shape = 'u32[]', space=smem, size = 0x4, offset = 0x4, fixed_abs, tag = 'smem constant byte address 0x4 - core index']
  #allocation1 [shape = 'u32[144,128]{1,0:T(1,128)}', space=vmem, size = 0x12000, scoped, tag = 'internal scratch']
  #allocation2 [shape = 'f32[16,128]{1,0:T(8,128)}', space=vmem, size = 0x2000, scoped, tag = 'scratch operand']
  %s0 = inlined_call_operand.hbm [shape: bf16[16,128], index: 0, kind: input, shape index: {}]
  %s1 = inlined_call_operand.hbm [shape: bf16[128,512], index: 1, kind: input, shape index: {}]
  %s2 = inlined_call_operand.hbm [shape: f32[1,512], index: 2, kind: input, shape index: {}]
  %s3 = inlined_call_operand.hbm [shape: bf16[512,128], index: 3, kind: input, shape index: {}]
  %s4 = inlined_call_operand.vmem [shape: f32[1,128], index: 4, kind: input, shape index: {}]
  %s5 = inlined_call_operand.hbm [shape: f32[16,128], index: 5, kind: output, shape index: {}]
  %s6 = sld [smem:[#allocation0]]
  $region81: #{tpu_custom_call.1} parent=0
    _
  %s8 = ssub.s32 1, %s6
  %s9 = scalar_select 0, %s8, %s6
  $region1: #{tpu_custom_call.1} parent=0
    #allocation3 [shape = 'u8[4096]{0}', space=vmem, size = 0x1000, scoped, tag = 'input window, operand 0, single buffered']
    #allocation4 [shape = 's32[2]{0}', space=sflag, size = 0x8, scoped, tag = 'scoped memory for tpu_custom_call.1']
    #allocation5 [shape = 's32[2]{0}', space=sflag, size = 0x8, scoped, tag = 'scoped memory for tpu_custom_call.1']
    #allocation6 [shape = 'u8[131072]{0}', space=vmem, size = 0x20000, scoped, tag = 'input window, operand 1']
    #allocation7 [shape = 's32[2]{0}', space=sflag, size = 0x8, scoped, tag = 'scoped memory for tpu_custom_call.1']
    #allocation8 [shape = 'u8[2048]{0}', space=vmem, size = 0x800, scoped, tag = 'input window, operand 2']
    #allocation9 [shape = 'u8[131072]{0}', space=vmem, size = 0x20000, scoped, tag = 'input window, operand 3']
    #allocation10 [shape = 's32[2]{0}', space=sflag, size = 0x8, scoped, tag = 'scoped memory for tpu_custom_call.1']
    #allocation11 [shape = 'u8[8192]{0}', space=vmem, size = 0x2000, scoped, tag = 'output window, operand 0, single buffered']
    %10 = vsyncpa [#allocation4], 0
    %11 = vsyncpa [#allocation7], 0
    %s12 = scalar_lea.sflag [#allocation7], 1
    %13 = vsyncpa %s12, 0
    %14 = vsyncpa [#allocation10], 0
    %s15 = scalar_lea.sflag [#allocation10], 1
    %16 = vsyncpa %s15, 0
    %17 = vsyncpa [#allocation5], 0
    loop: start=0, step=1, limit=4
    $region2: #{tpu_custom_call.1} parent=1 // loop_pre_header
      _
    $region3: #{tpu_custom_call.1} parent=1 // loop_header
      %s19 = sphi 0, %s23
      %p20 = scmp.ge.s32.totalorder %s19, 4
      %s26 = sphi 0, %s38
      %s27 = sphi 0, %s34
      %s28 = sphi 0, %s26
      %s29 = sphi 0, %s27
      %s30 = sphi 0, %s28
      %s31 = sphi 0, %s29
      %s41 = sphi 0, %s43
      %s44 = sphi 0, %s41
      %s45 = sphi 0, %s44
      %s61 = sphi 0, %s45
      %s67 = sphi 0, %s69
      %s70 = sphi 0, %s67
      %s71 = sphi 0, %s70
      %s87 = sphi 0, %s71
      %s93 = sphi 0, %s95
      %s96 = sphi 0, %s93
      %s97 = sphi 0, %s96
      %s113 = sphi 0, %s97
      %s119 = sphi 0, %s121
      %s122 = sphi 0, %s119
      %s123 = sphi 0, %s122
      %s139 = sphi 0, %s123
      %s143 = sphi 0, %s143
      %s145 = sphi 0, %s143
      %s146 = sphi 0, %s145
      %s160 = sphi 0, %s146
      %s166 = sphi 0, %s168
      %s169 = sphi 0, %s166
      %s170 = sphi 0, %s169
      %s186 = sphi 0, %s170
    $region4: #{tpu_custom_call.1} parent=1 // loop_header_branch
      %22 = sbr.rel (%p20) target = $region8
    $region5: #{tpu_custom_call.1} parent=1 // loop_body
      %s24 = ssub.s32 %s19, 1
      %s25 = ssub.s32 %s19, 2
      %s32 = sadd.s32 1, %s27
      %p33 = scmp.ge.s32.totalorder %s32, 2
      %s34 = scalar_select %p33, 0, %s32
      %s35 = sadd.s32 1, %s26
      %s36 = scalar_select %p33, %s35, %s26
      %p37 = scmp.ge.s32.totalorder %s36, 1
      %s38 = scalar_select %p37, 0, %s36
      %s39 = ssub.s32 %s26, %s38
      %p40 = scmp.eq.s32.totalorder %s39, 0
      %s42 = sadd.s32 %s41, 1
      %s43 = scalar_select %p40, %s41, %s42
      %p46 = pneg %p40
      %p47 = scmp.eq.s32.totalorder %s19, 1
      %p48 = por %p46, %p47
      %p49 = scmp.ne.s32.totalorder %s41, %s44
      %p50 = scmp.eq.s32.totalorder %s19, 0
      %p51 = por %p49, %p50
      %p52 = scmp.ne.s32.totalorder %s41, %s44
      %p53 = scmp.eq.s32.totalorder %s24, 1
      %p54 = por %p52, %p53
      %p55 = scmp.ne.s32.totalorder %s44, %s45
      %p56 = scmp.eq.s32.totalorder %s24, 0
      %p57 = por %p55, %p56
      %p58 = scmp.ne.s32.totalorder %s44, %s45
      %p59 = scmp.eq.s32.totalorder %s25, 1
      %p60 = por %p58, %p59
      %p62 = scmp.ne.s32.totalorder %s45, %s61
      %p63 = scmp.eq.s32.totalorder %s25, 0
      %p64 = por %p62, %p63
      %s65 = ssub.s32 %s27, %s34
      %p66 = scmp.eq.s32.totalorder %s65, 0
      %s68 = sadd.s32 %s67, 1
      %s69 = scalar_select %p66, %s67, %s68
      %p72 = pneg %p66
      %p73 = scmp.eq.s32.totalorder %s19, 1
      %p74 = por %p72, %p73
      %p75 = scmp.ne.s32.totalorder %s67, %s70
      %p76 = scmp.eq.s32.totalorder %s19, 0
      %p77 = por %p75, %p76
      %p78 = scmp.ne.s32.totalorder %s67, %s70
      %p79 = scmp.eq.s32.totalorder %s24, 1
      %p80 = por %p78, %p79
      %p81 = scmp.ne.s32.totalorder %s70, %s71
      %p82 = scmp.eq.s32.totalorder %s24, 0
      %p83 = por %p81, %p82
      %p84 = scmp.ne.s32.totalorder %s70, %s71
      %p85 = scmp.eq.s32.totalorder %s25, 1
      %p86 = por %p84, %p85
      %p88 = scmp.ne.s32.totalorder %s71, %s87
      %p89 = scmp.eq.s32.totalorder %s25, 0
      %p90 = por %p88, %p89
      %s91 = ssub.s32 %s27, %s34
      %p92 = scmp.eq.s32.totalorder %s91, 0
      %s94 = sadd.s32 %s93, 1
      %s95 = scalar_select %p92, %s93, %s94
      %p98 = pneg %p92
      %p99 = scmp.eq.s32.totalorder %s19, 1
      %p100 = por %p98, %p99
      %p101 = scmp.ne.s32.totalorder %s93, %s96
      %p102 = scmp.eq.s32.totalorder %s19, 0
      %p103 = por %p101, %p102
      %p104 = scmp.ne.s32.totalorder %s93, %s96
      %p105 = scmp.eq.s32.totalorder %s24, 1
      %p106 = por %p104, %p105
      %p107 = scmp.ne.s32.totalorder %s96, %s97
      %p108 = scmp.eq.s32.totalorder %s24, 0
      %p109 = por %p107, %p108
      %p110 = scmp.ne.s32.totalorder %s96, %s97
      %p111 = scmp.eq.s32.totalorder %s25, 1
      %p112 = por %p110, %p111
      %p114 = scmp.ne.s32.totalorder %s97, %s113
      %p115 = scmp.eq.s32.totalorder %s25, 0
      %p116 = por %p114, %p115
      %s117 = ssub.s32 %s27, %s34
      %p118 = scmp.eq.s32.totalorder %s117, 0
      %s120 = sadd.s32 %s119, 1
      %s121 = scalar_select %p118, %s119, %s120
      %p124 = pneg %p118
      %p125 = scmp.eq.s32.totalorder %s19, 1
      %p126 = por %p124, %p125
      %p127 = scmp.ne.s32.totalorder %s119, %s122
      %p128 = scmp.eq.s32.totalorder %s19, 0
      %p129 = por %p127, %p128
      %p130 = scmp.ne.s32.totalorder %s119, %s122
      %p131 = scmp.eq.s32.totalorder %s24, 1
      %p132 = por %p130, %p131
      %p133 = scmp.ne.s32.totalorder %s122, %s123
      %p134 = scmp.eq.s32.totalorder %s24, 0
      %p135 = por %p133, %p134
      %p136 = scmp.ne.s32.totalorder %s122, %s123
      %p137 = scmp.eq.s32.totalorder %s25, 1
      %p138 = por %p136, %p137
      %p140 = scmp.ne.s32.totalorder %s123, %s139
      %p141 = scmp.eq.s32.totalorder %s25, 0
      %p142 = por %p140, %p141
      %s144 = sadd.s32 %s143, 1
      %p147 = scmp.eq.s32.totalorder %s19, 1
      %p148 = scmp.ne.s32.totalorder %s143, %s145
      %p149 = scmp.eq.s32.totalorder %s19, 0
      %p150 = por %p148, %p149
      %p151 = scmp.ne.s32.totalorder %s143, %s145
      %p152 = scmp.eq.s32.totalorder %s24, 1
      %p153 = por %p151, %p152
      %p154 = scmp.ne.s32.totalorder %s145, %s146
      %p155 = scmp.eq.s32.totalorder %s24, 0
      %p156 = por %p154, %p155
      %p157 = scmp.ne.s32.totalorder %s145, %s146
      %p158 = scmp.eq.s32.totalorder %s25, 1
      %p159 = por %p157, %p158
      %p161 = scmp.ne.s32.totalorder %s146, %s160
      %p162 = scmp.eq.s32.totalorder %s25, 0
      %p163 = por %p161, %p162
      %s164 = ssub.s32 %s26, %s38
      %p165 = scmp.eq.s32.totalorder %s164, 0
      %s167 = sadd.s32 %s166, 1
      %s168 = scalar_select %p165, %s166, %s167
      %p171 = pneg %p165
      %p172 = scmp.eq.s32.totalorder %s19, 1
      %p173 = por %p171, %p172
      %p174 = scmp.ne.s32.totalorder %s166, %s169
      %p175 = scmp.eq.s32.totalorder %s19, 0
      %p176 = por %p174, %p175
      %p177 = scmp.ne.s32.totalorder %s166, %s169
      %p178 = scmp.eq.s32.totalorder %s24, 1
      %p179 = por %p177, %p178
      %p180 = scmp.ne.s32.totalorder %s169, %s170
      %p181 = scmp.eq.s32.totalorder %s24, 0
      %p182 = por %p180, %p181
      %p183 = scmp.ne.s32.totalorder %s169, %s170
      %p184 = scmp.eq.s32.totalorder %s25, 1
      %p185 = por %p183, %p184
      %p187 = scmp.ne.s32.totalorder %s170, %s186
      %p188 = scmp.eq.s32.totalorder %s25, 0
      %p189 = por %p187, %p188
      %p190 = scmp.le.s32.totalorder 1, %s19
      %p191 = scmp.lt.s32.totalorder %s19, 3
      %p192 = pnand %p190, %p191
      %p193 = pneg %p192
      // Predicated region
      $region9: #{tpu_custom_call.1} parent=5 // pred_check
        _
      $region10: #{tpu_custom_call.1} parent=5 // pred_check_branch
        %195 = sbr.rel (%p192) target = $region12
      $region11: #{tpu_custom_call.1} parent=5 // pred_region
        %s196 = ssub.s32 %s19, 1
        // Predicated region
        $region13: #{tpu_custom_call.1} parent=11 // pred_check
          %p197 = pneg %p57
        $region14: #{tpu_custom_call.1} parent=11 // pred_check_branch
          %199 = sbr.rel (%p197) target = $region16
        $region15: #{tpu_custom_call.1} parent=11 // pred_region
          %s200 = smul.u32 2, %s28
          %s202 = ssub.s32 128, 128
          %203 = vsyncadd [#allocation4], %s202
          %s204 = smul.addr %s200, 64
          %s205 = scalar_lea.hbm %s0, %s204
          %s206 = sshll.u32 [#allocation3], 4
          %s207 = int_to_ptr.vmem [resolvable:$true] %s206
          %212 = dma.hbm_to_vmem [thread:$0]  %s205, 128, %s207, [#allocation4], 64, 64, 4
        $region16: #{tpu_custom_call.1} parent=11 // pred_fallthru
          _
        // Predicated region
        $region17: #{tpu_custom_call.1} parent=11 // pred_check
          %p213 = pneg %p156
        $region18: #{tpu_custom_call.1} parent=11 // pred_check_branch
          %215 = sbr.rel (%p213) target = $region20
        $region19: #{tpu_custom_call.1} parent=11 // pred_region
          _
        $region20: #{tpu_custom_call.1} parent=11 // pred_fallthru
          _
      $region12: #{tpu_custom_call.1} parent=5 // pred_fallthru
        _
      %p216 = scmp.lt.s32.totalorder %s19, 2
      // Predicated region
      $region21: #{tpu_custom_call.1} parent=5 // pred_check
        %p217 = pneg %p216
      $region22: #{tpu_custom_call.1} parent=5 // pred_check_branch
        %219 = sbr.rel (%p217) target = $region24
      $region23: #{tpu_custom_call.1} parent=5 // pred_region
        // Predicated region
        $region25: #{tpu_custom_call.1} parent=23 // pred_check
          %p220 = pneg %p77
        $region26: #{tpu_custom_call.1} parent=23 // pred_check_branch
          %222 = sbr.rel (%p220) target = $region28
        $region27: #{tpu_custom_call.1} parent=23 // pred_region
          %s223 = sand.u32 %s19, 1
          %s224 = scalar_lea.sflag [#allocation7], %s223
          %s225 = sand.u32 %s67, 1
          %s226 = smul.addr %s225, 128
          %s227 = scalar_lea.vmem [#allocation6], %s226
          %s228 = smul.u32 2, %s27
          %s230 = ssub.s32 2048, 2048
          %231 = vsyncadd %s224, %s230
          %s232 = smul.addr %s228, 64
          %s233 = scalar_lea.hbm %s1, %s232
          %s234 = sshll.u32 %s227, 4
          %s235 = int_to_ptr.vmem [resolvable:$true] %s234
          %240 = dma.hbm_to_vmem [thread:$0]  %s233, 2048, %s235, %s224, 256, 128, 8
        $region28: #{tpu_custom_call.1} parent=23 // pred_fallthru
          _
        // Predicated region
        $region29: #{tpu_custom_call.1} parent=23 // pred_check
          %p241 = pneg %p103
        $region30: #{tpu_custom_call.1} parent=23 // pred_check_branch
          %243 = sbr.rel (%p241) target = $region32
        $region31: #{tpu_custom_call.1} parent=23 // pred_region
          %s244 = sand.u32 %s19, 1
          %s245 = scalar_lea.sflag [#allocation7], %s244
          %s246 = sand.u32 %s93, 1
          %s247 = smul.addr %s246, 2
          %s248 = scalar_lea.vmem [#allocation8], %s247
          %s249 = smul.u32 2, %s27
          %s251 = ssub.s32 32, 32
          %252 = vsyncadd %s245, %s251
          %s253 = smul.addr %s249, 16
          %s254 = scalar_lea.hbm %s2, %s253
          %s256 = sshll.u32 %s248, 4
          %s257 = int_to_ptr.vmem [resolvable:$true] %s256
          %259 = dma.hbm_to_vmem [thread:$0]  %s254, 32, %s257, %s245
        $region32: #{tpu_custom_call.1} parent=23 // pred_fallthru
          _
        // Predicated region
        $region33: #{tpu_custom_call.1} parent=23 // pred_check
          %p260 = pneg %p129
        $region34: #{tpu_custom_call.1} parent=23 // pred_check_branch
          %262 = sbr.rel (%p260) target = $region36
        $region35: #{tpu_custom_call.1} parent=23 // pred_region
          %s263 = sand.u32 %s119, 1
          %s264 = scalar_lea.sflag [#allocation10], %s263
          %s265 = sand.u32 %s119, 1
          %s266 = smul.addr %s265, 128
          %s267 = scalar_lea.vmem [#allocation9], %s266
          %s268 = smul.u32 32, %s27
          %s270 = ssub.s32 2048, 2048
          %271 = vsyncadd %s264, %s270
          %s272 = smul.addr %s268, 64
          %s273 = scalar_lea.hbm %s3, %s272
          %s274 = sshll.u32 %s267, 4
          %s275 = int_to_ptr.vmem [resolvable:$true] %s274
          %280 = dma.hbm_to_vmem [thread:$0]  %s273, 2048, %s275, %s264, 64, 64, 4
        $region36: #{tpu_custom_call.1} parent=23 // pred_fallthru
          _
      $region24: #{tpu_custom_call.1} parent=5 // pred_fallthru
        _
      %p281 = scmp.le.s32.totalorder 1, %s19
      %p282 = scmp.lt.s32.totalorder %s19, 3
      %p283 = pnand %p281, %p282
      %p284 = pneg %p283
      // Predicated region
      $region37: #{tpu_custom_call.1} parent=5 // pred_check
        _
      $region38: #{tpu_custom_call.1} parent=5 // pred_check_branch
        %286 = sbr.rel (%p283) target = $region40
      $region39: #{tpu_custom_call.1} parent=5 // pred_region
        %s287 = ssub.s32 %s19, 1
        // Predicated region
        $region41: #{tpu_custom_call.1} parent=39 // pred_check
          %p288 = pneg %p57
        $region42: #{tpu_custom_call.1} parent=39 // pred_check_branch
          %290 = sbr.rel (%p288) target = $region44
        $region43: #{tpu_custom_call.1} parent=39 // pred_region
          %291 = dma.done [#allocation4], 128
        $region44: #{tpu_custom_call.1} parent=39 // pred_fallthru
          _
        %s292 = sand.u32 %s24, 1
        %s293 = scalar_lea.sflag [#allocation7], %s292
        %s294 = sand.u32 %s70, 1
        %s295 = smul.addr %s294, 128
        %s296 = scalar_lea.vmem [#allocation6], %s295
        // Predicated region
        $region45: #{tpu_custom_call.1} parent=39 // pred_check
          %p297 = pneg %p83
        $region46: #{tpu_custom_call.1} parent=39 // pred_check_branch
          %299 = sbr.rel (%p297) target = $region48
        $region47: #{tpu_custom_call.1} parent=39 // pred_region
          %300 = dma.done %s293, 2048
        $region48: #{tpu_custom_call.1} parent=39 // pred_fallthru
          _
        %s301 = sand.u32 %s24, 1
        %s302 = scalar_lea.sflag [#allocation7], %s301
        %s303 = sand.u32 %s96, 1
        %s304 = smul.addr %s303, 2
        %s305 = scalar_lea.vmem [#allocation8], %s304
        // Predicated region
        $region49: #{tpu_custom_call.1} parent=39 // pred_check
          %p306 = pneg %p109
        $region50: #{tpu_custom_call.1} parent=39 // pred_check_branch
          %308 = sbr.rel (%p306) target = $region52
        $region51: #{tpu_custom_call.1} parent=39 // pred_region
          %309 = dma.done %s302, 32
        $region52: #{tpu_custom_call.1} parent=39 // pred_fallthru
          _
        %s310 = sand.u32 %s122, 1
        %s311 = scalar_lea.sflag [#allocation10], %s310
        %s312 = sand.u32 %s122, 1
        %s313 = smul.addr %s312, 128
        %s314 = scalar_lea.vmem [#allocation9], %s313
        // Predicated region
        $region53: #{tpu_custom_call.1} parent=39 // pred_check
          %p315 = pneg %p135
        $region54: #{tpu_custom_call.1} parent=39 // pred_check_branch
          %317 = sbr.rel (%p315) target = $region56
        $region55: #{tpu_custom_call.1} parent=39 // pred_region
          %318 = dma.done %s311, 2048
        $region56: #{tpu_custom_call.1} parent=39 // pred_fallthru
          _
        %p319 = pneg %p57
        %p320 = pneg %p54
        %s321 = sand.u32 %s24, 1
        %s322 = scalar_lea.sflag [#allocation7], %s321
        %s323 = sand.u32 %s70, 1
        %s324 = smul.addr %s323, 128
        %s325 = scalar_lea.vmem [#allocation6], %s324
        %p326 = pneg %p83
        %p327 = pneg %p80
        %s328 = sand.u32 %s24, 1
        %s329 = scalar_lea.sflag [#allocation7], %s328
        %s330 = sand.u32 %s96, 1
        %s331 = smul.addr %s330, 2
        %s332 = scalar_lea.vmem [#allocation8], %s331
        %p333 = pneg %p109
        %p334 = pneg %p106
        %s335 = sand.u32 %s122, 1
        %s336 = scalar_lea.sflag [#allocation10], %s335
        %s337 = sand.u32 %s122, 1
        %s338 = smul.addr %s337, 128
        %s339 = scalar_lea.vmem [#allocation9], %s338
        %p340 = pneg %p135
        %p341 = pneg %p132
        %p342 = pneg %p156
        %p343 = pneg %p153
        %p344 = pneg %p182
        %p345 = pneg %p179
        %s346 = smul.u32 2, %s28
        %s347 = smul.u32 2, %s29
        %s348 = smul.u32 2, %s29
        %s349 = smul.u32 32, %s29
        %s350 = smul.u32 2, %s28
        %v352 = vld [vmem:[#allocation3] sm:$0xf]
        %v353 = vld [vmem:[#allocation3 + $0x4] sm:$0xf]
        %v354 = vld [vmem:[%s296] sm:$0xff]
        %v355 = vld [vmem:[%s296 + $0x8] sm:$0xff]
        %v356 = vld [vmem:[%s296 + $0x10] sm:$0xff]
        %v357 = vld [vmem:[%s296 + $0x18] sm:$0xff]
        %v358 = vld [vmem:[%s296 + $0x20] sm:$0xff]
        %v359 = vld [vmem:[%s296 + $0x28] sm:$0xff]
        %v360 = vld [vmem:[%s296 + $0x30] sm:$0xff]
        %v361 = vld [vmem:[%s296 + $0x38] sm:$0xff]
        %v362 = vld [vmem:[%s296 + $0x40] sm:$0xff]
        %v363 = vld [vmem:[%s296 + $0x48] sm:$0xff]
        %v364 = vld [vmem:[%s296 + $0x50] sm:$0xff]
        %v365 = vld [vmem:[%s296 + $0x58] sm:$0xff]
        %v366 = vld [vmem:[%s296 + $0x60] sm:$0xff]
        %v367 = vld [vmem:[%s296 + $0x68] sm:$0xff]
        %v368 = vld [vmem:[%s296 + $0x70] sm:$0xff]
        %v369 = vld [vmem:[%s296 + $0x78] sm:$0xff]
        %v370 = vld [vmem:[%s305] sm:$0x3]
        %v372 = vlaneseq
        %v373 = vshrl.u32 %v372, 7
        %v374 = vsub.s32 0, %v373
        %v375 = vrot.slane %v370, %v374
        %v376 = vlaneseq
        %v377 = vshrl.u32 %v376, 7
        %v378 = vsub.s32 1, %v377
        %v379 = vrot.slane %v370, %v378
        %v384 = vunpack.c.l.b16 %v352
        %v385 = vunpack.c.l.b16 %v353
        %v386 = vpack.c.b16 %v385, %v384
        %v404 = vunpack.c.l.b16 %v354
        %v405 = vunpack.c.h.b16 %v354
        %v406 = vunpack.c.l.b16 %v355
        %v407 = vunpack.c.h.b16 %v355
        %v408 = vunpack.c.l.b16 %v356
        %v409 = vunpack.c.h.b16 %v356
        %v410 = vunpack.c.l.b16 %v357
        %v411 = vunpack.c.h.b16 %v357
        %v412 = vunpack.c.l.b16 %v358
        %v413 = vunpack.c.h.b16 %v358
        %v414 = vunpack.c.l.b16 %v359
        %v415 = vunpack.c.h.b16 %v359
        %v416 = vunpack.c.l.b16 %v360
        %v417 = vunpack.c.h.b16 %v360
        %v418 = vunpack.c.l.b16 %v361
        %v419 = vunpack.c.h.b16 %v361
        %v420 = vunpack.c.l.b16 %v362
        %v421 = vunpack.c.h.b16 %v362
        %v422 = vunpack.c.l.b16 %v363
        %v423 = vunpack.c.h.b16 %v363
        %v424 = vunpack.c.l.b16 %v364
        %v425 = vunpack.c.h.b16 %v364
        %v426 = vunpack.c.l.b16 %v365
        %v427 = vunpack.c.h.b16 %v365
        %v428 = vunpack.c.l.b16 %v366
        %v429 = vunpack.c.h.b16 %v366
        %v430 = vunpack.c.l.b16 %v367
        %v431 = vunpack.c.h.b16 %v367
        %v432 = vunpack.c.l.b16 %v368
        %v433 = vunpack.c.h.b16 %v368
        %v434 = vunpack.c.l.b16 %v369
        %v435 = vunpack.c.h.b16 %v369
        %v436 = vpack.c.b16 %v406, %v404
        %v437 = vpack.c.b16 %v407, %v405
        %v438 = vpack.c.b16 %v410, %v408
        %v439 = vpack.c.b16 %v411, %v409
        %v440 = vpack.c.b16 %v414, %v412
        %v441 = vpack.c.b16 %v415, %v413
        %v442 = vpack.c.b16 %v418, %v416
        %v443 = vpack.c.b16 %v419, %v417
        %v444 = vpack.c.b16 %v422, %v420
        %v445 = vpack.c.b16 %v423, %v421
        %v446 = vpack.c.b16 %v426, %v424
        %v447 = vpack.c.b16 %v427, %v425
        %v448 = vpack.c.b16 %v430, %v428
        %v449 = vpack.c.b16 %v431, %v429
        %v450 = vpack.c.b16 %v434, %v432
        %v451 = vpack.c.b16 %v435, %v433
        %468 = vmatprep.subr.bf16.mxu0 %v451
        %469 = vmatpush1.bf16.msra.mxu0 %v450
        %470 = vmatprep.subr.bf16.mxu0 %v449
        %471 = vmatpush1.bf16.msra.mxu0 %v448
        %472 = vmatprep.subr.bf16.mxu0 %v447
        %473 = vmatpush1.bf16.msra.mxu0 %v446
        %474 = vmatprep.subr.bf16.mxu0 %v445
        %475 = vmatpush1.bf16.msra.mxu0 %v444
        %476 = vmatprep.subr.bf16.mxu0 %v443
        %477 = vmatpush1.bf16.msra.mxu0 %v442
        %478 = vmatprep.subr.bf16.mxu0 %v441
        %479 = vmatpush1.bf16.msra.mxu0 %v440
        %480 = vmatprep.subr.bf16.mxu0 %v439
        %481 = vmatpush1.bf16.msra.mxu0 %v438
        %482 = vmatprep.subr.bf16.mxu0 %v437
        %483 = vmatpush1.bf16.msra.mxu0 %v436
        %484 = vmatprep.subr.bf16.mxu0 0
        %485 = vmatpush2.bf16.msra.mxu0 0
        %486 = vmatprep.subr.bf16.mxu0 0
        %487 = vmatpush2.bf16.msra.mxu0 0
        %488 = vmatprep.subr.bf16.mxu0 0
        %489 = vmatpush2.bf16.msra.mxu0 0
        %490 = vmatprep.subr.bf16.mxu0 0
        %491 = vmatpush2.bf16.msra.mxu0 0
        %492 = vmatprep.subr.bf16.mxu0 0
        %493 = vmatpush2.bf16.msra.mxu0 0
        %494 = vmatprep.subr.bf16.mxu0 0
        %495 = vmatpush2.bf16.msra.mxu0 0
        %496 = vmatprep.subr.bf16.mxu0 0
        %497 = vmatpush2.bf16.msra.mxu0 0
        %498 = vmatprep.subr.bf16.mxu0 0
        %499 = vmatpush2.bf16.msra.mxu0 0
        %500 = vmatprep.mubr.bf16.mxu0 0
        %501 = vmatmul.mubr.bf16.gmra.mxu0 %v386
        %v502 = vpop.f32.mrf.mxu0
        %v503 = vadd.f32 %v375, %v502
        %v504 = vpop.f32.mrf.mxu0
        %v505 = vadd.f32 %v379, %v504
        %v506 = vpop.f32.mrf.mxu0
        %v507 = vadd.f32 %v375, %v506
        %v508 = vpop.f32.mrf.mxu0
        %v509 = vadd.f32 %v379, %v508
        %510 = vdwg.mxu0
        %v511 = vmul.f32 %v503, %v503
        %v512 = vmul.f32 %v505, %v505
        %v513 = vmul.f32 %v507, %v507
        %v514 = vmul.f32 %v509, %v509
        %v515 = vmul.f32 %v503, %v511
        %v516 = vmul.f32 %v505, %v512
        %v517 = vmul.f32 %v507, %v513
        %v518 = vmul.f32 %v509, %v514
        %v519 = vmul.f32 %v515, 0.044715
        %v520 = vmul.f32 %v516, 0.044715
        %v521 = vmul.f32 %v517, 0.044715
        %v522 = vmul.f32 %v518, 0.044715
        %v523 = vadd.f32 %v503, %v519
        %v524 = vadd.f32 %v505, %v520
        %v525 = vadd.f32 %v507, %v521
        %v526 = vadd.f32 %v509, %v522
        %v527 = vmul.f32 %v523, 0.7978846
        %v528 = vmul.f32 %v524, 0.7978846
        %v529 = vmul.f32 %v525, 0.7978846
        %v530 = vmul.f32 %v526, 0.7978846
        %v531 = vtanh.pop %v527
        %v532 = vtanh.pop %v528
        %v533 = vtanh.pop %v529
        %v534 = vtanh.pop %v530
        %v535 = vadd.f32 %v531, 1.0
        %v536 = vadd.f32 %v532, 1.0
        %v537 = vadd.f32 %v533, 1.0
        %v538 = vadd.f32 %v534, 1.0
        %v539 = vmul.f32 %v535, 0.5
        %v540 = vmul.f32 %v536, 0.5
        %v541 = vmul.f32 %v537, 0.5
        %v542 = vmul.f32 %v538, 0.5
        %v543 = vmul.f32 %v503, %v539
        %v544 = vmul.f32 %v505, %v540
        %v545 = vmul.f32 %v507, %v541
        %v546 = vmul.f32 %v509, %v542
        %v547 = vpack.c.bf16 %v545, %v543
        %v548 = vpack.c.bf16 %v546, %v544
        %v549 = vld [vmem:[%s314] sm:$0xf]
        %v550 = vld [vmem:[%s314 + $0x4] sm:$0xf]
        %v551 = vld [vmem:[%s314 + $0x8] sm:$0xf]
        %v552 = vld [vmem:[%s314 + $0xc] sm:$0xf]
        %v553 = vld [vmem:[%s314 + $0x10] sm:$0xf]
        %v554 = vld [vmem:[%s314 + $0x14] sm:$0xf]
        %v555 = vld [vmem:[%s314 + $0x18] sm:$0xf]
        %v556 = vld [vmem:[%s314 + $0x1c] sm:$0xf]
        %v557 = vld [vmem:[%s314 + $0x20] sm:$0xf]
        %v558 = vld [vmem:[%s314 + $0x24] sm:$0xf]
        %v559 = vld [vmem:[%s314 + $0x28] sm:$0xf]
        %v560 = vld [vmem:[%s314 + $0x2c] sm:$0xf]
        %v561 = vld [vmem:[%s314 + $0x30] sm:$0xf]
        %v562 = vld [vmem:[%s314 + $0x34] sm:$0xf]
        %v563 = vld [vmem:[%s314 + $0x38] sm:$0xf]
        %v564 = vld [vmem:[%s314 + $0x3c] sm:$0xf]
        %v565 = vld [vmem:[%s314 + $0x40] sm:$0xf]
        %v566 = vld [vmem:[%s314 + $0x44] sm:$0xf]
        %v567 = vld [vmem:[%s314 + $0x48] sm:$0xf]
        %v568 = vld [vmem:[%s314 + $0x4c] sm:$0xf]
        %v569 = vld [vmem:[%s314 + $0x50] sm:$0xf]
        %v570 = vld [vmem:[%s314 + $0x54] sm:$0xf]
        %v571 = vld [vmem:[%s314 + $0x58] sm:$0xf]
        %v572 = vld [vmem:[%s314 + $0x5c] sm:$0xf]
        %v573 = vld [vmem:[%s314 + $0x60] sm:$0xf]
        %v574 = vld [vmem:[%s314 + $0x64] sm:$0xf]
        %v575 = vld [vmem:[%s314 + $0x68] sm:$0xf]
        %v576 = vld [vmem:[%s314 + $0x6c] sm:$0xf]
        %v577 = vld [vmem:[%s314 + $0x70] sm:$0xf]
        %v578 = vld [vmem:[%s314 + $0x74] sm:$0xf]
        %v579 = vld [vmem:[%s314 + $0x78] sm:$0xf]
        %v580 = vld [vmem:[%s314 + $0x7c] sm:$0xf]
        %v613 = vunpack.c.l.b16 %v549
        %v614 = vunpack.c.l.b16 %v550
        %v615 = vunpack.c.l.b16 %v551
        %v616 = vunpack.c.l.b16 %v552
        %v617 = vunpack.c.l.b16 %v553
        %v618 = vunpack.c.l.b16 %v554
        %v619 = vunpack.c.l.b16 %v555
        %v620 = vunpack.c.l.b16 %v556
        %v621 = vunpack.c.l.b16 %v557
        %v622 = vunpack.c.l.b16 %v558
        %v623 = vunpack.c.l.b16 %v559
        %v624 = vunpack.c.l.b16 %v560
        %v625 = vunpack.c.l.b16 %v561
        %v626 = vunpack.c.l.b16 %v562
        %v627 = vunpack.c.l.b16 %v563
        %v628 = vunpack.c.l.b16 %v564
        %v629 = vunpack.c.l.b16 %v565
        %v630 = vunpack.c.l.b16 %v566
        %v631 = vunpack.c.l.b16 %v567
        %v632 = vunpack.c.l.b16 %v568
        %v633 = vunpack.c.l.b16 %v569
        %v634 = vunpack.c.l.b16 %v570
        %v635 = vunpack.c.l.b16 %v571
        %v636 = vunpack.c.l.b16 %v572
        %v637 = vunpack.c.l.b16 %v573
        %v638 = vunpack.c.l.b16 %v574
        %v639 = vunpack.c.l.b16 %v575
        %v640 = vunpack.c.l.b16 %v576
        %v641 = vunpack.c.l.b16 %v577
        %v642 = vunpack.c.l.b16 %v578
        %v643 = vunpack.c.l.b16 %v579
        %v644 = vunpack.c.l.b16 %v580
        %v645 = vpack.c.b16 %v614, %v613
        %v646 = vpack.c.b16 %v616, %v615
        %v647 = vpack.c.b16 %v618, %v617
        %v648 = vpack.c.b16 %v620, %v619
        %v649 = vpack.c.b16 %v622, %v621
        %v650 = vpack.c.b16 %v624, %v623
        %v651 = vpack.c.b16 %v626, %v625
        %v652 = vpack.c.b16 %v628, %v627
        %v653 = vpack.c.b16 %v630, %v629
        %v654 = vpack.c.b16 %v632, %v631
        %v655 = vpack.c.b16 %v634, %v633
        %v656 = vpack.c.b16 %v636, %v635
        %v657 = vpack.c.b16 %v638, %v637
        %v658 = vpack.c.b16 %v640, %v639
        %v659 = vpack.c.b16 %v642, %v641
        %v660 = vpack.c.b16 %v644, %v643
        %677 = vmatprep.subr.bf16.mxu0 0
        %678 = vmatpush1.bf16.msra.mxu0 %v652
        %679 = vmatprep.subr.bf16.mxu0 0
        %680 = vmatpush1.bf16.msra.mxu0 %v651
        %681 = vmatprep.subr.bf16.mxu0 0
        %682 = vmatpush1.bf16.msra.mxu0 %v650
        %683 = vmatprep.subr.bf16.mxu0 0
        %684 = vmatpush1.bf16.msra.mxu0 %v649
        %685 = vmatprep.subr.bf16.mxu0 0
        %686 = vmatpush1.bf16.msra.mxu0 %v648
        %687 = vmatprep.subr.bf16.mxu0 0
        %688 = vmatpush1.bf16.msra.mxu0 %v647
        %689 = vmatprep.subr.bf16.mxu0 0
        %690 = vmatpush1.bf16.msra.mxu0 %v646
        %691 = vmatprep.subr.bf16.mxu0 0
        %692 = vmatpush1.bf16.msra.mxu0 %v645
        %693 = vmatprep.subr.bf16.mxu0 0
        %694 = vmatpush2.bf16.msra.mxu0 %v660
        %695 = vmatprep.subr.bf16.mxu0 0
        %696 = vmatpush2.bf16.msra.mxu0 %v659
        %697 = vmatprep.subr.bf16.mxu0 0
        %698 = vmatpush2.bf16.msra.mxu0 %v658
        %699 = vmatprep.subr.bf16.mxu0 0
        %700 = vmatpush2.bf16.msra.mxu0 %v657
        %701 = vmatprep.subr.bf16.mxu0 0
        %702 = vmatpush2.bf16.msra.mxu0 %v656
        %703 = vmatprep.subr.bf16.mxu0 0
        %704 = vmatpush2.bf16.msra.mxu0 %v655
        %705 = vmatprep.subr.bf16.mxu0 0
        %706 = vmatpush2.bf16.msra.mxu0 %v654
        %707 = vmatprep.subr.bf16.mxu0 0
        %708 = vmatpush2.bf16.msra.mxu0 %v653
        %709 = vmatprep.mubr.bf16.mxu0 %v548
        %710 = vmatmul.mubr.bf16.gmra.mxu0 %v547
        %v711 = vpop.f32.mrf.mxu0
        %v712 = vadd.f32 0.0, %v711
        %v713 = vpop.f32.mrf.mxu0
        %v714 = vpop.f32.mrf.mxu0
        %v715 = vadd.f32 0.0, %v714
        %v716 = vpop.f32.mrf.mxu0
        %717 = vdwg.mxu0
        %p718 = scmp.eq.s32.totalorder %s29, 0
        // Predicated region
        $region57: #{tpu_custom_call.1} parent=39 // pred_check
          %p719 = pneg %p718
        $region58: #{tpu_custom_call.1} parent=39 // pred_check_branch
          %721 = sbr.rel (%p719) target = $region60
        $region59: #{tpu_custom_call.1} parent=39 // pred_region
          %722 = vst [vmem:[#allocation2] sm:$0xff] %v712
          %723 = vst [vmem:[#allocation2 + $0x8] sm:$0xff] %v715
        $region60: #{tpu_custom_call.1} parent=39 // pred_fallthru
          _
        %p724 = scmp.gt.s32.totalorder %s29, 0
        // Predicated region
        $region61: #{tpu_custom_call.1} parent=39 // pred_check
          %p725 = pneg %p724
        $region62: #{tpu_custom_call.1} parent=39 // pred_check_branch
          %727 = sbr.rel (%p725) target = $region64
        $region63: #{tpu_custom_call.1} parent=39 // pred_region
          %v728 = vld [vmem:[#allocation2] sm:$0xff]
          %v729 = vld [vmem:[#allocation2 + $0x8] sm:$0xff]
          %v730 = vadd.f32 %v728, %v712
          %v731 = vadd.f32 %v729, %v715
          %732 = vst [vmem:[#allocation2] sm:$0xff] %v730
          %733 = vst [vmem:[#allocation2 + $0x8] sm:$0xff] %v731
        $region64: #{tpu_custom_call.1} parent=39 // pred_fallthru
          _
        %p734 = scmp.eq.s32.totalorder %s29, 1
        // Predicated region
        $region65: #{tpu_custom_call.1} parent=39 // pred_check
          %p735 = pneg %p734
        $region66: #{tpu_custom_call.1} parent=39 // pred_check_branch
          %737 = sbr.rel (%p735) target = $region68
        $region67: #{tpu_custom_call.1} parent=39 // pred_region
          %v738 = vld [vmem:[#allocation2] sm:$0xff]
          %v739 = vld [vmem:[#allocation2 + $0x8] sm:$0xff]
          %v740 = vld [vmem:[%s4] sm:$0x1]
          %v742 = vlaneseq
          %v743 = vshrl.u32 %v742, 7
          %v744 = vsub.s32 0, %v743
          %v745 = vrot.slane %v740, %v744
          %v747 = vadd.f32 %v738, %v745
          %v748 = vadd.f32 %v739, %v745
          %749 = vst [vmem:[#allocation11] sm:$0xff] %v747
          %750 = vst [vmem:[#allocation11 + $0x8] sm:$0xff] %v748
        $region68: #{tpu_custom_call.1} parent=39 // pred_fallthru
          _
        // Predicated region
        $region69: #{tpu_custom_call.1} parent=39 // pred_check
          %p751 = pneg %p179
        $region70: #{tpu_custom_call.1} parent=39 // pred_check_branch
          %753 = sbr.rel (%p751) target = $region72
        $region71: #{tpu_custom_call.1} parent=39 // pred_region
          %s754 = smul.u32 2, %s28
          %s756 = ssub.s32 256, 256
          %757 = vsyncadd [#allocation5], %s756
          %s758 = smul.addr %s754, 128
          %s759 = scalar_lea.hbm %s5, %s758
          %s760 = sshll.u32 [#allocation11], 4
          %s761 = int_to_ptr.vmem [resolvable:$true] %s760
          %766 = dma.vmem_to_hbm [thread:$0]  %s761, 256, %s759, [#allocation5], 128, 128, 8
        $region72: #{tpu_custom_call.1} parent=39 // pred_fallthru
          _
        // Predicated region
        $region73: #{tpu_custom_call.1} parent=39 // pred_check
          %p767 = pneg %p179
        $region74: #{tpu_custom_call.1} parent=39 // pred_check_branch
          %769 = sbr.rel (%p767) target = $region76
        $region75: #{tpu_custom_call.1} parent=39 // pred_region
          %770 = dma.done [#allocation5], 256
        $region76: #{tpu_custom_call.1} parent=39 // pred_fallthru
          _
      $region40: #{tpu_custom_call.1} parent=5 // pred_fallthru
        _
      %p771 = scmp.le.s32.totalorder 2, %s19
      // Predicated region
      $region77: #{tpu_custom_call.1} parent=5 // pred_check
        %p772 = pneg %p771
      $region78: #{tpu_custom_call.1} parent=5 // pred_check_branch
        %774 = sbr.rel (%p772) target = $region80
      $region79: #{tpu_custom_call.1} parent=5 // pred_region
        %s775 = ssub.s32 %s19, 2
      $region80: #{tpu_custom_call.1} parent=5 // pred_fallthru
        _
    $region6: #{tpu_custom_call.1} parent=1 // loop_footer
      %s23 = sadd.s32 1, %s19
    $region7: #{tpu_custom_call.1} parent=1 // loop_footer_branch
      %18 = sbr.rel target = $region3
    $region8: #{tpu_custom_call.1} parent=1 // loop_exit
      _
    %776 = vsyncpa [#allocation4], 1
    %s777 = scalar_lea.sflag [#allocation4], 1
    %778 = vsyncpa %s777, 1
    %779 = vsyncpa [#allocation7], 1
    %s780 = scalar_lea.sflag [#allocation7], 1
    %781 = vsyncpa %s780, 1
    %782 = vsyncpa [#allocation10], 1
    %s783 = scalar_lea.sflag [#allocation10], 1
    %784 = vsyncpa %s783, 1
    %785 = vsyncpa [#allocation5], 1
    %s786 = scalar_lea.sflag [#allocation5], 1
    %787 = vsyncpa %s786, 1

</llo_original>
